<compile_context>
chip_gen: v5e
topology: v5e:2x2
jax: 0.10.0
libtpu: 0.0.40
codegen_flags: <defaults>
</compile_context>

<pallas_src>
import functools

import jax
import jax.numpy as jnp
from jax.experimental import pallas as pl
from jax.experimental.pallas import tpu as pltpu

LN_EPS = 1e-5     # nn.LayerNorm default
LANE = 128
SUBLANE = 8
_MiB = 1024 * 1024


def _round_up(n, m):
    return ((n + m - 1) // m) * m


def _cdiv(a, b):
    return -(-a // b)


def _supports_single_buffer():
    """Import-time feature test for BlockSpec(pipeline_mode=pl.Buffered(1))."""
    if not hasattr(pl, "Buffered"):
        return False
    try:
        pl.BlockSpec((SUBLANE, LANE), lambda i: (0, 0),
                     pipeline_mode=pl.Buffered(1))
        return True
    except Exception:
        return False


_SINGLE_BUFFER_OK = _supports_single_buffer()


def _tpu_generation_defaults():
    """Per-generation VMEM budget / tile defaults.

    v5e/v6e: 128 MiB VMEM per TensorCore -> large budget + big batch tiles.
    v7x:     64 MiB VMEM per TensorCore, 2 TCs -> tighter budget, even grid.
    """
    try:
        cap = int(pltpu.get_tpu_info().vmem_capacity_bytes)
    except Exception:
        cap = 128 * _MiB
    if cap >= 96 * _MiB:      # v5e / v6e class
        return dict(budget=96 * _MiB, limit_cap=110 * _MiB,
                    tile_b=512, multi_core=False)
    # v7x class: half the VMEM, 2 TensorCores per chip.
    return dict(budget=40 * _MiB, limit_cap=56 * _MiB,
                tile_b=256, multi_core=True)


def _masked_layernorm(h, gamma, beta, n_true, mask):
    """LayerNorm over the first n_true columns of h (remaining columns are zero
    padding).  Numerically identical to nn.LayerNorm(n_true) on the true slice.
    `mask` is the precomputed column mask (None when n_true == padded width)."""
    inv_n = 1.0 / float(n_true)
    mu = jnp.sum(h, axis=-1, keepdims=True) * inv_n
    diff = h - mu
    if mask is not None:
        diff = jnp.where(mask, diff, 0.0)
    var = jnp.sum(diff * diff, axis=-1, keepdims=True) * inv_n
    return diff * jax.lax.rsqrt(var + LN_EPS) * gamma + beta


def _projector_kernel(x_ref,
                      w1_ref, b1_ref, g1_ref, be1_ref,
                      w2_ref, b2_ref, g2_ref, be2_ref,
                      w3_ref, b3_ref, g3_ref, be3_ref,
                      o_ref, *, h_true, o_true, mxu_dtype):
    # Grid-invariant row vectors: load once (f32), reuse.
    b1 = b1_ref[...]; g1 = g1_ref[...]; be1 = be1_ref[...]
    b2 = b2_ref[...]; g2 = g2_ref[...]; be2 = be2_ref[...]
    b3 = b3_ref[...]; g3 = g3_ref[...]; be3 = be3_ref[...]

    tb = x_ref.shape[0]
    Hp = w1_ref.shape[1]
    Op = w3_ref.shape[1]

    # Padding masks: built once per grid step, reused for LN1/LN2 (and LN3).
    h_mask = None
    if h_true != Hp:
        h_mask = jax.lax.broadcasted_iota(jnp.int32, (tb, Hp), 1) < h_true
    o_mask = None
    if o_true != Op:
        o_mask = jax.lax.broadcasted_iota(jnp.int32, (tb, Op), 1) < o_true

    # Cast to the MXU feed dtype in-kernel (cheap VPU op, hidden under matmul).
    x = x_ref[...].astype(mxu_dtype)

    # fc1 -> LN1 -> ReLU   (dropout is identity in eval mode)
    h = jnp.dot(x, w1_ref[...], preferred_element_type=jnp.float32) + b1
    h = jnp.maximum(_masked_layernorm(h, g1, be1, h_true, h_mask), 0.0)

    # fc2 -> LN2 -> ReLU
    h = jnp.dot(h.astype(mxu_dtype), w2_ref[...],
                preferred_element_type=jnp.float32) + b2
    h = jnp.maximum(_masked_layernorm(h, g2, be2, h_true, h_mask), 0.0)

    # fc3 -> LN3 -> ReLU -> tanh
    h = jnp.dot(h.astype(mxu_dtype), w3_ref[...],
                preferred_element_type=jnp.float32) + b3
    h = jnp.maximum(_masked_layernorm(h, g3, be3, o_true, o_mask), 0.0)

    o_ref[...] = jnp.tanh(h).astype(o_ref.dtype)
    # TODO(synk): training-mode dropout (stateful PRNG masking) intentionally
    # omitted; forward here matches eval()/inference semantics.


def projector_forward(x, params, *, tile_b=None, mxu_dtype=jnp.bfloat16,
                      vmem_budget_bytes=None):
    (w1, b1, g1, be1, w2, b2, g2, be2, w3, b3, g3, be3) = params
    B, F = x.shape
    H = w1.shape[1]
    O = w3.shape[1]

    # Lane-dense padded feature dims.
    Fp, Hp, Op = (_round_up(d, LANE) for d in (F, H, O))

    gen = _tpu_generation_defaults()
    if vmem_budget_bytes is None:
        vmem_budget_bytes = gen["budget"]
    if tile_b is None:
        tile_b = gen["tile_b"]

    mxu_bytes = jnp.dtype(mxu_dtype).itemsize
    out_bytes = jnp.dtype(x.dtype).itemsize
    feed_bytes = max(mxu_bytes, jnp.dtype(x.dtype).itemsize)  # conservative

    # Weight / bias / LN-param VMEM footprint; buffer count matches the path
    # we will actually use (single-buffered only when the feature exists).
    w_buf = 1 if _SINGLE_BUFFER_OK else 2
    weight_bytes = w_buf * ((Fp * Hp + Hp * Hp + Hp * Op) * mxu_bytes
                            + (6 * Hp + 3 * Op) * 4)
    # TODO(synk): for very large hidden sizes where weight_bytes alone exceeds
    # the budget (e.g. H >~ 4k on v7x's 64 MiB), K-tile fc2 with
    # pltpu.emit_pipeline instead of shrinking tile_b below 128.

    def vmem_estimate(tb):
        act = 2 * tb * Fp * feed_bytes       # double-buffered input tile
        out = 2 * tb * Op * out_bytes        # double-buffered output tile
        inter = 4 * tb * max(Hp, Op) * 4     # f32 fc/LN intermediates + masks
        return act + out + inter + weight_bytes

    # Largest SUBLANE-aligned batch tile that fits the per-generation budget.
    tile_b = max(SUBLANE, min(int(tile_b), _round_up(B, SUBLANE)))
    tile_b = _round_up(tile_b, SUBLANE)
    while tile_b > SUBLANE and vmem_estimate(tile_b) > vmem_budget_bytes:
        tile_b = _round_up(max(SUBLANE, tile_b // 2), SUBLANE)

    # v7x only (2 TensorCores): aim for an even number of grid steps so the
    # "parallel" batch axis splits evenly across cores; keep SUBLANE alignment.
    if gen["multi_core"] and tile_b >= 2 * LANE:
        steps = _cdiv(B, tile_b)
        if steps % 2 == 1:
            tile_b = max(SUBLANE, _round_up(_cdiv(B, steps + 1), SUBLANE))

    Bp = _round_up(B, tile_b)
    grid = (Bp // tile_b,)

    def pad2(a, rows, cols, dtype):
        a = a.astype(dtype)
        return jnp.pad(a, ((0, rows - a.shape[0]), (0, cols - a.shape[1])))

    # Only pad x when the shape actually needs it; otherwise feed the native
    # array and let the kernel cast (avoids an extra HBM round trip through a
    # wrapper-side pad/cast op).  When padding is needed, fuse the cast into it.
    if Bp != B or Fp != F:
        xp = pad2(x, Bp, Fp, mxu_dtype)
    else:
        xp = x

    w1p = pad2(w1, Fp, Hp, mxu_dtype)
    w2p = pad2(w2, Hp, Hp, mxu_dtype)
    w3p = pad2(w3, Hp, Op, mxu_dtype)
    b1p, g1p, be1p = (pad2(v, 1, Hp, jnp.float32) for v in (b1, g1, be1))
    b2p, g2p, be2p = (pad2(v, 1, Hp, jnp.float32) for v in (b2, g2, be2))
    b3p, g3p, be3p = (pad2(v, 1, Op, jnp.float32) for v in (b3, g3, be3))

    vmem_limit = int(min(gen["limit_cap"],
                         max(32 * _MiB, 2 * vmem_estimate(tile_b))))

    def inv(shape):
        if _SINGLE_BUFFER_OK:
            # Grid-invariant operand: one VMEM copy is enough.
            return pl.BlockSpec(shape, lambda i: (0, 0),
                                pipeline_mode=pl.Buffered(1))
        return pl.BlockSpec(shape, lambda i: (0, 0))

    kernel = functools.partial(_projector_kernel, h_true=H, o_true=O,
                               mxu_dtype=mxu_dtype)
    out = pl.pallas_call(
        kernel,
        out_shape=jax.ShapeDtypeStruct((Bp, Op), x.dtype),
        grid_spec=pltpu.PrefetchScalarGridSpec(
            num_scalar_prefetch=0,
            grid=grid,
            in_specs=[
                pl.BlockSpec((tile_b, Fp), lambda i: (i, 0)),   # x tile
                inv((Fp, Hp)), inv((1, Hp)), inv((1, Hp)), inv((1, Hp)),
                inv((Hp, Hp)), inv((1, Hp)), inv((1, Hp)), inv((1, Hp)),
                inv((Hp, Op)), inv((1, Op)), inv((1, Op)), inv((1, Op)),
            ],
            out_specs=pl.BlockSpec((tile_b, Op), lambda i: (i, 0)),
        ),
        compiler_params=pltpu.CompilerParams(
            dimension_semantics=("parallel",),
            vmem_limit_bytes=vmem_limit,
        ),
    )(xp, w1p, b1p, g1p, be1p, w2p, b2p, g2p, be2p, w3p, b3p, g3p, be3p)

    return out[:B, :O]


def init_params(key, input_size, hidden_size, output_size, initrange=0.1):
    """Deterministic init mirroring Projector.init_weights():
       fc weights ~ U(-0.1, 0.1), fc biases = 0, LayerNorm gamma=1, beta=0."""
    k1, k2, k3 = jax.random.split(key, 3)
    # PyTorch Linear weight is (out, in); we store the transpose (in, out).
    w1 = jax.random.uniform(k1, (input_size, hidden_size), jnp.float32, -initrange, initrange)
    w2 = jax.random.uniform(k2, (hidden_size, hidden_size), jnp.float32, -initrange, initrange)
    w3 = jax.random.uniform(k3, (hidden_size, output_size), jnp.float32, -initrange, initrange)
    b1 = jnp.zeros((1, hidden_size), jnp.float32)
    b2 = jnp.zeros((1, hidden_size), jnp.float32)
    b3 = jnp.zeros((1, output_size), jnp.float32)
    g1 = jnp.ones((1, hidden_size), jnp.float32); be1 = jnp.zeros((1, hidden_size), jnp.float32)
    g2 = jnp.ones((1, hidden_size), jnp.float32); be2 = jnp.zeros((1, hidden_size), jnp.float32)
    g3 = jnp.ones((1, output_size), jnp.float32); be3 = jnp.zeros((1, output_size), jnp.float32)
    return (w1, b1, g1, be1, w2, b2, g2, be2, w3, b3, g3, be3)


def reference_forward(x, params):
    (w1, b1, g1, be1, w2, b2, g2, be2, w3, b3, g3, be3) = params

    def ln(h, g, b):
        mu = jnp.mean(h, axis=-1, keepdims=True)
        var = jnp.mean((h - mu) ** 2, axis=-1, keepdims=True)
        return (h - mu) * jax.lax.rsqrt(var + LN_EPS) * g + b

    h = jnp.maximum(ln(x @ w1 + b1, g1, be1), 0.0)
    h = jnp.maximum(ln(h @ w2 + b2, g2, be2), 0.0)
    h = jnp.maximum(ln(h @ w3 + b3, g3, be3), 0.0)
    return jnp.tanh(h)


if __name__ == "__main__":
    key = jax.random.PRNGKey(0)
    kx, kp, kx2, kp2 = jax.random.split(key, 4)

    # Case 1: small, non-aligned shapes (exercises padding + masked LayerNorm).
    B, input_size, hidden_size, output_size = 48, 32, 64, 16
    x = jax.random.normal(kx, (B, input_size), jnp.float32)
    params = init_params(kp, input_size, hidden_size, output_size)
    ref = reference_forward(x, params)

    # Default bf16 MXU feed (f32 accumulation, f32 LN/relu/tanh).
    out_bf16 = jax.block_until_ready(projector_forward(x, params))
    assert out_bf16.shape == (B, output_size)
    assert jnp.allclose(out_bf16, ref, atol=3e-2, rtol=3e-2)

    # f32 MXU path: math identical to the reference (zero padding is exact).
    out_f32 = jax.block_until_ready(
        projector_forward(x, params, mxu_dtype=jnp.float32))
    assert out_f32.shape == (B, output_size)
    assert jnp.allclose(out_f32, ref, atol=1e-5, rtol=1e-5)

    # Case 2: lane-aligned shapes (no wrapper padding; in-kernel cast path).
    B2, F2, H2, O2 = 256, 128, 128, 128
    x2 = jax.random.normal(kx2, (B2, F2), jnp.float32)
    params2 = init_params(kp2, F2, H2, O2)
    ref2 = reference_forward(x2, params2)
    out2 = jax.block_until_ready(projector_forward(x2, params2))
    assert out2.shape == (B2, O2)
    assert jnp.allclose(out2, ref2, atol=5e-2, rtol=5e-2)

    print("KERNEL_OK")
</pallas_src>

<mosaic_0001>
module attributes {stable_mosaic.version = 11 : i64} {
  func.func @_projector_kernel(%arg0: i32, %arg1: memref<48x128xbf16, #tpu.memory_space<vmem>>, %arg2: memref<128x128xbf16, #tpu.memory_space<vmem>>, %arg3: memref<1x128xf32, #tpu.memory_space<vmem>>, %arg4: memref<1x128xf32, #tpu.memory_space<vmem>>, %arg5: memref<1x128xf32, #tpu.memory_space<vmem>>, %arg6: memref<128x128xbf16, #tpu.memory_space<vmem>>, %arg7: memref<1x128xf32, #tpu.memory_space<vmem>>, %arg8: memref<1x128xf32, #tpu.memory_space<vmem>>, %arg9: memref<1x128xf32, #tpu.memory_space<vmem>>, %arg10: memref<128x128xbf16, #tpu.memory_space<vmem>>, %arg11: memref<1x128xf32, #tpu.memory_space<vmem>>, %arg12: memref<1x128xf32, #tpu.memory_space<vmem>>, %arg13: memref<1x128xf32, #tpu.memory_space<vmem>>, %arg14: memref<48x128xf32, #tpu.memory_space<vmem>>) attributes {dimension_semantics = [#tpu.dimension_semantics<parallel>], iteration_bounds = array<i64: 1>, scalar_prefetch = 0 : i64, scratch_operands = 0 : i64, tpu.core_type = #tpu.core_type<tc>, window_params = [{transform_indices = @transform_0, window_bounds = array<i64: 48, 128>}, {pipeline_mode = #tpu.pipeline_mode<synchronous>, transform_indices = @transform_1, window_bounds = array<i64: 128, 128>}, {pipeline_mode = #tpu.pipeline_mode<synchronous>, transform_indices = @transform_2, window_bounds = array<i64: 1, 128>}, {pipeline_mode = #tpu.pipeline_mode<synchronous>, transform_indices = @transform_3, window_bounds = array<i64: 1, 128>}, {pipeline_mode = #tpu.pipeline_mode<synchronous>, transform_indices = @transform_4, window_bounds = array<i64: 1, 128>}, {pipeline_mode = #tpu.pipeline_mode<synchronous>, transform_indices = @transform_5, window_bounds = array<i64: 128, 128>}, {pipeline_mode = #tpu.pipeline_mode<synchronous>, transform_indices = @transform_6, window_bounds = array<i64: 1, 128>}, {pipeline_mode = #tpu.pipeline_mode<synchronous>, transform_indices = @transform_7, window_bounds = array<i64: 1, 128>}, {pipeline_mode = #tpu.pipeline_mode<synchronous>, transform_indices = @transform_8, window_bounds = array<i64: 1, 128>}, {pipeline_mode = #tpu.pipeline_mode<synchronous>, transform_indices = @transform_9, window_bounds = array<i64: 128, 128>}, {pipeline_mode = #tpu.pipeline_mode<synchronous>, transform_indices = @transform_10, window_bounds = array<i64: 1, 128>}, {pipeline_mode = #tpu.pipeline_mode<synchronous>, transform_indices = @transform_11, window_bounds = array<i64: 1, 128>}, {pipeline_mode = #tpu.pipeline_mode<synchronous>, transform_indices = @transform_12, window_bounds = array<i64: 1, 128>}, {transform_indices = @transform_13, window_bounds = array<i64: 48, 128>}]} {
    %c0 = arith.constant 0 : index
    %c0_0 = arith.constant 0 : index
    %0 = vector.load %arg3[%c0, %c0_0] : memref<1x128xf32, #tpu.memory_space<vmem>>, vector<1x128xf32>
    %c0_1 = arith.constant 0 : index
    %c0_2 = arith.constant 0 : index
    %1 = vector.load %arg4[%c0_1, %c0_2] : memref<1x128xf32, #tpu.memory_space<vmem>>, vector<1x128xf32>
    %c0_3 = arith.constant 0 : index
    %c0_4 = arith.constant 0 : index
    %2 = vector.load %arg5[%c0_3, %c0_4] : memref<1x128xf32, #tpu.memory_space<vmem>>, vector<1x128xf32>
    %c0_5 = arith.constant 0 : index
    %c0_6 = arith.constant 0 : index
    %3 = vector.load %arg7[%c0_5, %c0_6] : memref<1x128xf32, #tpu.memory_space<vmem>>, vector<1x128xf32>
    %c0_7 = arith.constant 0 : index
    %c0_8 = arith.constant 0 : index
    %4 = vector.load %arg8[%c0_7, %c0_8] : memref<1x128xf32, #tpu.memory_space<vmem>>, vector<1x128xf32>
    %c0_9 = arith.constant 0 : index
    %c0_10 = arith.constant 0 : index
    %5 = vector.load %arg9[%c0_9, %c0_10] : memref<1x128xf32, #tpu.memory_space<vmem>>, vector<1x128xf32>
    %c0_11 = arith.constant 0 : index
    %c0_12 = arith.constant 0 : index
    %6 = vector.load %arg11[%c0_11, %c0_12] : memref<1x128xf32, #tpu.memory_space<vmem>>, vector<1x128xf32>
    %c0_13 = arith.constant 0 : index
    %c0_14 = arith.constant 0 : index
    %7 = vector.load %arg12[%c0_13, %c0_14] : memref<1x128xf32, #tpu.memory_space<vmem>>, vector<1x128xf32>
    %c0_15 = arith.constant 0 : index
    %c0_16 = arith.constant 0 : index
    %8 = vector.load %arg13[%c0_15, %c0_16] : memref<1x128xf32, #tpu.memory_space<vmem>>, vector<1x128xf32>
    %9 = tpu.iota {dimensions = array<i32: 1>} : vector<48x128xi32>
    %c64_i32 = arith.constant 64 : i32
    %10 = vector.broadcast %c64_i32 : i32 to vector<48x128xi32>
    %11 = arith.cmpi slt, %9, %10 : vector<48x128xi32>
    %12 = tpu.iota {dimensions = array<i32: 1>} : vector<48x128xi32>
    %c16_i32 = arith.constant 16 : i32
    %13 = vector.broadcast %c16_i32 : i32 to vector<48x128xi32>
    %14 = arith.cmpi slt, %12, %13 : vector<48x128xi32>
    %c0_17 = arith.constant 0 : index
    %c0_18 = arith.constant 0 : index
    %15 = vector.load %arg1[%c0_17, %c0_18] : memref<48x128xbf16, #tpu.memory_space<vmem>>, vector<48x128xbf16>
    %c0_19 = arith.constant 0 : index
    %c0_20 = arith.constant 0 : index
    %16 = vector.load %arg2[%c0_19, %c0_20] : memref<128x128xbf16, #tpu.memory_space<vmem>>, vector<128x128xbf16>
    %cst = arith.constant dense<0.000000e+00> : vector<48x128xf32>
    %17 = tpu.matmul %15, %16, %cst {dimension_numbers = #tpu.dot_dimension_numbers<[1], [0], [0], [1], [0, 0, 1, 1], [], []>} : vector<48x128xbf16>, vector<128x128xbf16>, vector<48x128xf32> -> vector<48x128xf32>
    %18 = vector.broadcast %0 : vector<1x128xf32> to vector<48x128xf32>
    %19 = arith.addf %17, %18 : vector<48x128xf32>
    %cst_21 = arith.constant dense<0.000000e+00> : vector<48xf32>
    %20 = vector.multi_reduction <add>, %19, %cst_21 [1] : vector<48x128xf32> to vector<48xf32>
    %21 = vector.shape_cast %20 : vector<48xf32> to vector<48x1xf32>
    %cst_22 = arith.constant 1.562500e-02 : f32
    %22 = vector.broadcast %cst_22 : f32 to vector<48x1xf32>
    %23 = arith.mulf %21, %22 : vector<48x1xf32>
    %24 = vector.broadcast %23 : vector<48x1xf32> to vector<48x128xf32>
    %25 = arith.subf %19, %24 : vector<48x128xf32>
    %cst_23 = arith.constant 0.000000e+00 : f32
    %26 = vector.broadcast %cst_23 : f32 to vector<48x128xf32>
    %27 = arith.select %11, %25, %26 : vector<48x128xi1>, vector<48x128xf32>
    %28 = arith.mulf %27, %27 : vector<48x128xf32>
    %cst_24 = arith.constant dense<0.000000e+00> : vector<48xf32>
    %29 = vector.multi_reduction <add>, %28, %cst_24 [1] : vector<48x128xf32> to vector<48xf32>
    %30 = vector.shape_cast %29 : vector<48xf32> to vector<48x1xf32>
    %cst_25 = arith.constant 1.562500e-02 : f32
    %31 = vector.broadcast %cst_25 : f32 to vector<48x1xf32>
    %32 = arith.mulf %30, %31 : vector<48x1xf32>
    %cst_26 = arith.constant 9.99999974E-6 : f32
    %33 = vector.broadcast %cst_26 : f32 to vector<48x1xf32>
    %34 = arith.addf %32, %33 : vector<48x1xf32>
    %35 = math.rsqrt %34 : vector<48x1xf32>
    %36 = vector.broadcast %35 : vector<48x1xf32> to vector<48x128xf32>
    %37 = arith.mulf %27, %36 : vector<48x128xf32>
    %38 = vector.broadcast %1 : vector<1x128xf32> to vector<48x128xf32>
    %39 = arith.mulf %37, %38 : vector<48x128xf32>
    %40 = vector.broadcast %2 : vector<1x128xf32> to vector<48x128xf32>
    %41 = arith.addf %39, %40 : vector<48x128xf32>
    %cst_27 = arith.constant 0.000000e+00 : f32
    %42 = vector.broadcast %cst_27 : f32 to vector<48x128xf32>
    %43 = arith.maximumf %41, %42 : vector<48x128xf32>
    %44 = arith.truncf %43 : vector<48x128xf32> to vector<48x128xbf16>
    %c0_28 = arith.constant 0 : index
    %c0_29 = arith.constant 0 : index
    %45 = vector.load %arg6[%c0_28, %c0_29] : memref<128x128xbf16, #tpu.memory_space<vmem>>, vector<128x128xbf16>
    %cst_30 = arith.constant dense<0.000000e+00> : vector<48x128xf32>
    %46 = tpu.matmul %44, %45, %cst_30 {dimension_numbers = #tpu.dot_dimension_numbers<[1], [0], [0], [1], [0, 0, 1, 1], [], []>} : vector<48x128xbf16>, vector<128x128xbf16>, vector<48x128xf32> -> vector<48x128xf32>
    %47 = vector.broadcast %3 : vector<1x128xf32> to vector<48x128xf32>
    %48 = arith.addf %46, %47 : vector<48x128xf32>
    %cst_31 = arith.constant dense<0.000000e+00> : vector<48xf32>
    %49 = vector.multi_reduction <add>, %48, %cst_31 [1] : vector<48x128xf32> to vector<48xf32>
    %50 = vector.shape_cast %49 : vector<48xf32> to vector<48x1xf32>
    %cst_32 = arith.constant 1.562500e-02 : f32
    %51 = vector.broadcast %cst_32 : f32 to vector<48x1xf32>
    %52 = arith.mulf %50, %51 : vector<48x1xf32>
    %53 = vector.broadcast %52 : vector<48x1xf32> to vector<48x128xf32>
    %54 = arith.subf %48, %53 : vector<48x128xf32>
    %cst_33 = arith.constant 0.000000e+00 : f32
    %55 = vector.broadcast %cst_33 : f32 to vector<48x128xf32>
    %56 = arith.select %11, %54, %55 : vector<48x128xi1>, vector<48x128xf32>
    %57 = arith.mulf %56, %56 : vector<48x128xf32>
    %cst_34 = arith.constant dense<0.000000e+00> : vector<48xf32>
    %58 = vector.multi_reduction <add>, %57, %cst_34 [1] : vector<48x128xf32> to vector<48xf32>
    %59 = vector.shape_cast %58 : vector<48xf32> to vector<48x1xf32>
    %cst_35 = arith.constant 1.562500e-02 : f32
    %60 = vector.broadcast %cst_35 : f32 to vector<48x1xf32>
    %61 = arith.mulf %59, %60 : vector<48x1xf32>
    %cst_36 = arith.constant 9.99999974E-6 : f32
    %62 = vector.broadcast %cst_36 : f32 to vector<48x1xf32>
    %63 = arith.addf %61, %62 : vector<48x1xf32>
    %64 = math.rsqrt %63 : vector<48x1xf32>
    %65 = vector.broadcast %64 : vector<48x1xf32> to vector<48x128xf32>
    %66 = arith.mulf %56, %65 : vector<48x128xf32>
    %67 = vector.broadcast %4 : vector<1x128xf32> to vector<48x128xf32>
    %68 = arith.mulf %66, %67 : vector<48x128xf32>
    %69 = vector.broadcast %5 : vector<1x128xf32> to vector<48x128xf32>
    %70 = arith.addf %68, %69 : vector<48x128xf32>
    %cst_37 = arith.constant 0.000000e+00 : f32
    %71 = vector.broadcast %cst_37 : f32 to vector<48x128xf32>
    %72 = arith.maximumf %70, %71 : vector<48x128xf32>
    %73 = arith.truncf %72 : vector<48x128xf32> to vector<48x128xbf16>
    %c0_38 = arith.constant 0 : index
    %c0_39 = arith.constant 0 : index
    %74 = vector.load %arg10[%c0_38, %c0_39] : memref<128x128xbf16, #tpu.memory_space<vmem>>, vector<128x128xbf16>
    %cst_40 = arith.constant dense<0.000000e+00> : vector<48x128xf32>
    %75 = tpu.matmul %73, %74, %cst_40 {dimension_numbers = #tpu.dot_dimension_numbers<[1], [0], [0], [1], [0, 0, 1, 1], [], []>} : vector<48x128xbf16>, vector<128x128xbf16>, vector<48x128xf32> -> vector<48x128xf32>
    %76 = vector.broadcast %6 : vector<1x128xf32> to vector<48x128xf32>
    %77 = arith.addf %75, %76 : vector<48x128xf32>
    %cst_41 = arith.constant dense<0.000000e+00> : vector<48xf32>
    %78 = vector.multi_reduction <add>, %77, %cst_41 [1] : vector<48x128xf32> to vector<48xf32>
    %79 = vector.shape_cast %78 : vector<48xf32> to vector<48x1xf32>
    %cst_42 = arith.constant 6.250000e-02 : f32
    %80 = vector.broadcast %cst_42 : f32 to vector<48x1xf32>
    %81 = arith.mulf %79, %80 : vector<48x1xf32>
    %82 = vector.broadcast %81 : vector<48x1xf32> to vector<48x128xf32>
    %83 = arith.subf %77, %82 : vector<48x128xf32>
    %cst_43 = arith.constant 0.000000e+00 : f32
    %84 = vector.broadcast %cst_43 : f32 to vector<48x128xf32>
    %85 = arith.select %14, %83, %84 : vector<48x128xi1>, vector<48x128xf32>
    %86 = arith.mulf %85, %85 : vector<48x128xf32>
    %cst_44 = arith.constant dense<0.000000e+00> : vector<48xf32>
    %87 = vector.multi_reduction <add>, %86, %cst_44 [1] : vector<48x128xf32> to vector<48xf32>
    %88 = vector.shape_cast %87 : vector<48xf32> to vector<48x1xf32>
    %cst_45 = arith.constant 6.250000e-02 : f32
    %89 = vector.broadcast %cst_45 : f32 to vector<48x1xf32>
    %90 = arith.mulf %88, %89 : vector<48x1xf32>
    %cst_46 = arith.constant 9.99999974E-6 : f32
    %91 = vector.broadcast %cst_46 : f32 to vector<48x1xf32>
    %92 = arith.addf %90, %91 : vector<48x1xf32>
    %93 = math.rsqrt %92 : vector<48x1xf32>
    %94 = vector.broadcast %93 : vector<48x1xf32> to vector<48x128xf32>
    %95 = arith.mulf %85, %94 : vector<48x128xf32>
    %96 = vector.broadcast %7 : vector<1x128xf32> to vector<48x128xf32>
    %97 = arith.mulf %95, %96 : vector<48x128xf32>
    %98 = vector.broadcast %8 : vector<1x128xf32> to vector<48x128xf32>
    %99 = arith.addf %97, %98 : vector<48x128xf32>
    %cst_47 = arith.constant 0.000000e+00 : f32
    %100 = vector.broadcast %cst_47 : f32 to vector<48x128xf32>
    %101 = arith.maximumf %99, %100 : vector<48x128xf32>
    %102 = math.tanh %101 : vector<48x128xf32>
    %c0_48 = arith.constant 0 : index
    %c0_49 = arith.constant 0 : index
    %103 = vector.load %arg14[%c0_48, %c0_49] : memref<48x128xf32, #tpu.memory_space<vmem>>, vector<48x128xf32>
    tpu.vector_store %arg14[%c0_48, %c0_49], %102 {strides = array<i32>} : memref<48x128xf32, #tpu.memory_space<vmem>>, vector<48x128xf32>,
    return
  }
  func.func @transform_0(%arg0: i32) -> (i32, i32) {
    %c0_i32 = arith.constant 0 : i32
    %c0_i32_0 = arith.constant 0 : i32
    return %arg0, %c0_i32 : i32, i32
  }
  func.func @transform_1(%arg0: i32) -> (i32, i32) {
    %c0_i32 = arith.constant 0 : i32
    %c0_i32_0 = arith.constant 0 : i32
    %c0_i32_1 = arith.constant 0 : i32
    return %c0_i32, %c0_i32_0 : i32, i32
  }
  func.func @transform_2(%arg0: i32) -> (i32, i32) {
    %c0_i32 = arith.constant 0 : i32
    %c0_i32_0 = arith.constant 0 : i32
    %c0_i32_1 = arith.constant 0 : i32
    return %c0_i32, %c0_i32_0 : i32, i32
  }
  func.func @transform_3(%arg0: i32) -> (i32, i32) {
    %c0_i32 = arith.constant 0 : i32
    %c0_i32_0 = arith.constant 0 : i32
    %c0_i32_1 = arith.constant 0 : i32
    return %c0_i32, %c0_i32_0 : i32, i32
  }
  func.func @transform_4(%arg0: i32) -> (i32, i32) {
    %c0_i32 = arith.constant 0 : i32
    %c0_i32_0 = arith.constant 0 : i32
    %c0_i32_1 = arith.constant 0 : i32
    return %c0_i32, %c0_i32_0 : i32, i32
  }
  func.func @transform_5(%arg0: i32) -> (i32, i32) {
    %c0_i32 = arith.constant 0 : i32
    %c0_i32_0 = arith.constant 0 : i32
    %c0_i32_1 = arith.constant 0 : i32
    return %c0_i32, %c0_i32_0 : i32, i32
  }
  func.func @transform_6(%arg0: i32) -> (i32, i32) {
    %c0_i32 = arith.constant 0 : i32
    %c0_i32_0 = arith.constant 0 : i32
    %c0_i32_1 = arith.constant 0 : i32
    return %c0_i32, %c0_i32_0 : i32, i32
  }
  func.func @transform_7(%arg0: i32) -> (i32, i32) {
    %c0_i32 = arith.constant 0 : i32
    %c0_i32_0 = arith.constant 0 : i32
    %c0_i32_1 = arith.constant 0 : i32
    return %c0_i32, %c0_i32_0 : i32, i32
  }
  func.func @transform_8(%arg0: i32) -> (i32, i32) {
    %c0_i32 = arith.constant 0 : i32
    %c0_i32_0 = arith.constant 0 : i32
    %c0_i32_1 = arith.constant 0 : i32
    return %c0_i32, %c0_i32_0 : i32, i32
  }
  func.func @transform_9(%arg0: i32) -> (i32, i32) {
    %c0_i32 = arith.constant 0 : i32
    %c0_i32_0 = arith.constant 0 : i32
    %c0_i32_1 = arith.constant 0 : i32
    return %c0_i32, %c0_i32_0 : i32, i32
  }
  func.func @transform_10(%arg0: i32) -> (i32, i32) {
    %c0_i32 = arith.constant 0 : i32
    %c0_i32_0 = arith.constant 0 : i32
    %c0_i32_1 = arith.constant 0 : i32
    return %c0_i32, %c0_i32_0 : i32, i32
  }
  func.func @transform_11(%arg0: i32) -> (i32, i32) {
    %c0_i32 = arith.constant 0 : i32
    %c0_i32_0 = arith.constant 0 : i32
    %c0_i32_1 = arith.constant 0 : i32
    return %c0_i32, %c0_i32_0 : i32, i32
  }
  func.func @transform_12(%arg0: i32) -> (i32, i32) {
    %c0_i32 = arith.constant 0 : i32
    %c0_i32_0 = arith.constant 0 : i32
    %c0_i32_1 = arith.constant 0 : i32
    return %c0_i32, %c0_i32_0 : i32, i32
  }
  func.func @transform_13(%arg0: i32) -> (i32, i32) {
    %c0_i32 = arith.constant 0 : i32
    %c0_i32_0 = arith.constant 0 : i32
    return %arg0, %c0_i32 : i32, i32
  }
}

</mosaic_0001>

<llo_original>
// kernel: tpu_custom_call.1
$region0: #{tpu_custom_call.1}
  #allocation0 [shape = 'u32[]', space=smem, size = 0x4, offset = 0x4, fixed_abs, tag = 'smem constant byte address 0x4 - core index']
  #allocation1 [shape = 'u32[72,128]{1,0:T(1,128)}', space=vmem, size = 0x9000, scoped, tag = 'internal scratch']
  %s0 = inlined_call_operand.hbm [shape: bf16[48,128], index: 0, kind: input, shape index: {}]
  %s1 = inlined_call_operand.hbm [shape: bf16[128,128], index: 1, kind: input, shape index: {}]
  %s2 = inlined_call_operand.vmem [shape: f32[1,128], index: 2, kind: input, shape index: {}]
  %s3 = inlined_call_operand.vmem [shape: f32[1,128], index: 3, kind: input, shape index: {}]
  %s4 = inlined_call_operand.vmem [shape: f32[1,128], index: 4, kind: input, shape index: {}]
  %s5 = inlined_call_operand.hbm [shape: bf16[128,128], index: 5, kind: input, shape index: {}]
  %s6 = inlined_call_operand.vmem [shape: f32[1,128], index: 6, kind: input, shape index: {}]
  %s7 = inlined_call_operand.vmem [shape: f32[1,128], index: 7, kind: input, shape index: {}]
  %s8 = inlined_call_operand.vmem [shape: f32[1,128], index: 8, kind: input, shape index: {}]
  %s9 = inlined_call_operand.hbm [shape: bf16[128,128], index: 9, kind: input, shape index: {}]
  %s10 = inlined_call_operand.vmem [shape: f32[1,128], index: 10, kind: input, shape index: {}]
  %s11 = inlined_call_operand.vmem [shape: f32[1,128], index: 11, kind: input, shape index: {}]
  %s12 = inlined_call_operand.vmem [shape: f32[1,128], index: 12, kind: input, shape index: {}]
  %s13 = inlined_call_operand.hbm [shape: f32[48,128], index: 13, kind: output, shape index: {}]
  %s14 = sld [smem:[#allocation0]]
  $region78: #{tpu_custom_call.1} parent=0
    _
  %s16 = ssub.s32 1, %s14
  %s17 = scalar_select 0, %s16, %s14
  $region1: #{tpu_custom_call.1} parent=0
    #allocation2 [shape = 'u8[12288]{0}', space=vmem, size = 0x3000, scoped, tag = 'input window, operand 0, single buffered']
    #allocation3 [shape = 's32[1]{0}', space=sflag, size = 0x4, scoped, tag = 'scoped memory for tpu_custom_call.1']
    #allocation4 [shape = 's32[1]{0}', space=sflag, size = 0x4, scoped, tag = 'scoped memory for tpu_custom_call.1']
    #allocation5 [shape = 'u8[32768]{0}', space=vmem, size = 0x8000, scoped, tag = 'input window, operand 1, single buffered']
    #allocation6 [shape = 's32[1]{0}', space=sflag, size = 0x4, scoped, tag = 'scoped memory for tpu_custom_call.1']
    #allocation7 [shape = 'u8[32768]{0}', space=vmem, size = 0x8000, scoped, tag = 'input window, operand 5, single buffered']
    #allocation8 [shape = 'u8[32768]{0}', space=vmem, size = 0x8000, scoped, tag = 'input window, operand 9, single buffered']
    #allocation9 [shape = 's32[1]{0}', space=sflag, size = 0x4, scoped, tag = 'scoped memory for tpu_custom_call.1']
    #allocation10 [shape = 'u8[24576]{0}', space=vmem, size = 0x6000, scoped, tag = 'output window, operand 0, single buffered']
    %18 = vsyncpa [#allocation3], 0
    %19 = vsyncpa [#allocation6], 0
    %20 = vsyncpa [#allocation9], 0
    %21 = vsyncpa [#allocation4], 0
    // Predicated region
    $region2: #{tpu_custom_call.1} parent=1 // pred_check
      _
    $region3: #{tpu_custom_call.1} parent=1 // pred_check_branch
      %23 = sbr.rel (0) target = $region5
    $region4: #{tpu_custom_call.1} parent=1 // pred_region
      %25 = vsyncadd [#allocation3], 0
      %s26 = sshll.u32 %s0, 4
      %s27 = int_to_ptr.hbm [resolvable:$true] %s26
      %s28 = sshll.u32 [#allocation2], 4
      %s29 = int_to_ptr.vmem [resolvable:$true] %s28
      %34 = dma.hbm_to_vmem [thread:$0]  %s27, 384, %s29, [#allocation3], 64, 64, 4
    $region5: #{tpu_custom_call.1} parent=1 // pred_fallthru
      _
    // Predicated region
    $region6: #{tpu_custom_call.1} parent=1 // pred_check
      _
    $region7: #{tpu_custom_call.1} parent=1 // pred_check_branch
      %36 = sbr.rel (0) target = $region9
    $region8: #{tpu_custom_call.1} parent=1 // pred_region
      %38 = vsyncadd [#allocation6], 0
      %s39 = sshll.u32 %s1, 4
      %s40 = int_to_ptr.hbm [resolvable:$true] %s39
      %s41 = sshll.u32 [#allocation5], 4
      %s42 = int_to_ptr.vmem [resolvable:$true] %s41
      %47 = dma.hbm_to_vmem [thread:$0]  %s40, 1024, %s42, [#allocation6], 64, 64, 4
    $region9: #{tpu_custom_call.1} parent=1 // pred_fallthru
      _
    // Predicated region
    $region10: #{tpu_custom_call.1} parent=1 // pred_check
      _
    $region11: #{tpu_custom_call.1} parent=1 // pred_check_branch
      %49 = sbr.rel (0) target = $region13
    $region12: #{tpu_custom_call.1} parent=1 // pred_region
      _
    $region13: #{tpu_custom_call.1} parent=1 // pred_fallthru
      _
    // Predicated region
    $region14: #{tpu_custom_call.1} parent=1 // pred_check
      _
    $region15: #{tpu_custom_call.1} parent=1 // pred_check_branch
      %51 = sbr.rel (0) target = $region17
    $region16: #{tpu_custom_call.1} parent=1 // pred_region
      _
    $region17: #{tpu_custom_call.1} parent=1 // pred_fallthru
      _
    // Predicated region
    $region18: #{tpu_custom_call.1} parent=1 // pred_check
      _
    $region19: #{tpu_custom_call.1} parent=1 // pred_check_branch
      %53 = sbr.rel (0) target = $region21
    $region20: #{tpu_custom_call.1} parent=1 // pred_region
      _
    $region21: #{tpu_custom_call.1} parent=1 // pred_fallthru
      _
    // Predicated region
    $region22: #{tpu_custom_call.1} parent=1 // pred_check
      _
    $region23: #{tpu_custom_call.1} parent=1 // pred_check_branch
      %55 = sbr.rel (0) target = $region25
    $region24: #{tpu_custom_call.1} parent=1 // pred_region
      %57 = vsyncadd [#allocation6], 0
      %s58 = sshll.u32 %s5, 4
      %s59 = int_to_ptr.hbm [resolvable:$true] %s58
      %s60 = sshll.u32 [#allocation7], 4
      %s61 = int_to_ptr.vmem [resolvable:$true] %s60
      %66 = dma.hbm_to_vmem [thread:$0]  %s59, 1024, %s61, [#allocation6], 64, 64, 4
    $region25: #{tpu_custom_call.1} parent=1 // pred_fallthru
      _
    // Predicated region
    $region26: #{tpu_custom_call.1} parent=1 // pred_check
      _
    $region27: #{tpu_custom_call.1} parent=1 // pred_check_branch
      %68 = sbr.rel (0) target = $region29
    $region28: #{tpu_custom_call.1} parent=1 // pred_region
      _
    $region29: #{tpu_custom_call.1} parent=1 // pred_fallthru
      _
    // Predicated region
    $region30: #{tpu_custom_call.1} parent=1 // pred_check
      _
    $region31: #{tpu_custom_call.1} parent=1 // pred_check_branch
      %70 = sbr.rel (0) target = $region33
    $region32: #{tpu_custom_call.1} parent=1 // pred_region
      _
    $region33: #{tpu_custom_call.1} parent=1 // pred_fallthru
      _
    // Predicated region
    $region34: #{tpu_custom_call.1} parent=1 // pred_check
      _
    $region35: #{tpu_custom_call.1} parent=1 // pred_check_branch
      %72 = sbr.rel (0) target = $region37
    $region36: #{tpu_custom_call.1} parent=1 // pred_region
      _
    $region37: #{tpu_custom_call.1} parent=1 // pred_fallthru
      _
    // Predicated region
    $region38: #{tpu_custom_call.1} parent=1 // pred_check
      _
    $region39: #{tpu_custom_call.1} parent=1 // pred_check_branch
      %74 = sbr.rel (0) target = $region41
    $region40: #{tpu_custom_call.1} parent=1 // pred_region
      %76 = vsyncadd [#allocation9], 0
      %s77 = sshll.u32 %s9, 4
      %s78 = int_to_ptr.hbm [resolvable:$true] %s77
      %s79 = sshll.u32 [#allocation8], 4
      %s80 = int_to_ptr.vmem [resolvable:$true] %s79
      %85 = dma.hbm_to_vmem [thread:$0]  %s78, 1024, %s80, [#allocation9], 64, 64, 4
    $region41: #{tpu_custom_call.1} parent=1 // pred_fallthru
      _
    // Predicated region
    $region42: #{tpu_custom_call.1} parent=1 // pred_check
      _
    $region43: #{tpu_custom_call.1} parent=1 // pred_check_branch
      %87 = sbr.rel (0) target = $region45
    $region44: #{tpu_custom_call.1} parent=1 // pred_region
      _
    $region45: #{tpu_custom_call.1} parent=1 // pred_fallthru
      _
    // Predicated region
    $region46: #{tpu_custom_call.1} parent=1 // pred_check
      _
    $region47: #{tpu_custom_call.1} parent=1 // pred_check_branch
      %89 = sbr.rel (0) target = $region49
    $region48: #{tpu_custom_call.1} parent=1 // pred_region
      _
    $region49: #{tpu_custom_call.1} parent=1 // pred_fallthru
      _
    // Predicated region
    $region50: #{tpu_custom_call.1} parent=1 // pred_check
      _
    $region51: #{tpu_custom_call.1} parent=1 // pred_check_branch
      %91 = sbr.rel (0) target = $region53
    $region52: #{tpu_custom_call.1} parent=1 // pred_region
      _
    $region53: #{tpu_custom_call.1} parent=1 // pred_fallthru
      _
    // Predicated region
    $region54: #{tpu_custom_call.1} parent=1 // pred_check
      _
    $region55: #{tpu_custom_call.1} parent=1 // pred_check_branch
      %93 = sbr.rel (0) target = $region57
    $region56: #{tpu_custom_call.1} parent=1 // pred_region
      %95 = dma.done [#allocation3], 384
    $region57: #{tpu_custom_call.1} parent=1 // pred_fallthru
      _
    // Predicated region
    $region58: #{tpu_custom_call.1} parent=1 // pred_check
      _
    $region59: #{tpu_custom_call.1} parent=1 // pred_check_branch
      %97 = sbr.rel (0) target = $region61
    $region60: #{tpu_custom_call.1} parent=1 // pred_region
      %99 = dma.done [#allocation6], 1024
    $region61: #{tpu_custom_call.1} parent=1 // pred_fallthru
      _
    // Predicated region
    $region62: #{tpu_custom_call.1} parent=1 // pred_check
      _
    $region63: #{tpu_custom_call.1} parent=1 // pred_check_branch
      %101 = sbr.rel (0) target = $region65
    $region64: #{tpu_custom_call.1} parent=1 // pred_region
      %103 = dma.done [#allocation6], 1024
    $region65: #{tpu_custom_call.1} parent=1 // pred_fallthru
      _
    // Predicated region
    $region66: #{tpu_custom_call.1} parent=1 // pred_check
      _
    $region67: #{tpu_custom_call.1} parent=1 // pred_check_branch
      %105 = sbr.rel (0) target = $region69
    $region68: #{tpu_custom_call.1} parent=1 // pred_region
      %107 = dma.done [#allocation9], 1024
    $region69: #{tpu_custom_call.1} parent=1 // pred_fallthru
      _
    %v108 = vld [vmem:[%s2] sm:$0x1]
    %v109 = vld [vmem:[%s3] sm:$0x1]
    %v110 = vld [vmem:[%s4] sm:$0x1]
    %v111 = vld [vmem:[%s6] sm:$0x1]
    %v112 = vld [vmem:[%s7] sm:$0x1]
    %v113 = vld [vmem:[%s8] sm:$0x1]
    %v114 = vld [vmem:[%s10] sm:$0x1]
    %v115 = vld [vmem:[%s11] sm:$0x1]
    %v116 = vld [vmem:[%s12] sm:$0x1]
    %v117 = vlaneseq
    %v118 = vand.u32 %v117, 127
    %vm119 = vcmp.lt.s32.totalorder %v118, 64
    %vm120 = vcmp.lt.s32.totalorder %v118, 16
    %v121 = vld [vmem:[#allocation2] sm:$0xf]
    %v122 = vld [vmem:[#allocation2 + $0x4] sm:$0xf]
    %v123 = vld [vmem:[#allocation2 + $0x8] sm:$0xf]
    %v124 = vld [vmem:[#allocation2 + $0xc] sm:$0xf]
    %v125 = vld [vmem:[#allocation2 + $0x10] sm:$0xf]
    %v126 = vld [vmem:[#allocation2 + $0x14] sm:$0xf]
    %v127 = vld [vmem:[#allocation5] sm:$0xf]
    %v128 = vld [vmem:[#allocation5 + $0x4] sm:$0xf]
    %v129 = vld [vmem:[#allocation5 + $0x8] sm:$0xf]
    %v130 = vld [vmem:[#allocation5 + $0xc] sm:$0xf]
    %v131 = vld [vmem:[#allocation5 + $0x10] sm:$0xf]
    %v132 = vld [vmem:[#allocation5 + $0x14] sm:$0xf]
    %v133 = vld [vmem:[#allocation5 + $0x18] sm:$0xf]
    %v134 = vld [vmem:[#allocation5 + $0x1c] sm:$0xf]
    %v135 = vld [vmem:[#allocation5 + $0x20] sm:$0xf]
    %v136 = vld [vmem:[#allocation5 + $0x24] sm:$0xf]
    %v137 = vld [vmem:[#allocation5 + $0x28] sm:$0xf]
    %v138 = vld [vmem:[#allocation5 + $0x2c] sm:$0xf]
    %v139 = vld [vmem:[#allocation5 + $0x30] sm:$0xf]
    %v140 = vld [vmem:[#allocation5 + $0x34] sm:$0xf]
    %v141 = vld [vmem:[#allocation5 + $0x38] sm:$0xf]
    %v142 = vld [vmem:[#allocation5 + $0x3c] sm:$0xf]
    %v144 = vperm.slane %v108, 0
    %v152 = vunpack.c.l.b16 %v121
    %v153 = vunpack.c.l.b16 %v122
    %v154 = vunpack.c.l.b16 %v123
    %v155 = vunpack.c.l.b16 %v124
    %v156 = vunpack.c.l.b16 %v125
    %v157 = vunpack.c.l.b16 %v126
    %v158 = vpack.c.b16 %v153, %v152
    %v159 = vpack.c.b16 %v155, %v154
    %v160 = vpack.c.b16 %v157, %v156
    %v180 = vunpack.c.l.b16 %v127
    %v181 = vunpack.c.l.b16 %v128
    %v182 = vunpack.c.l.b16 %v129
    %v183 = vunpack.c.l.b16 %v130
    %v184 = vunpack.c.l.b16 %v131
    %v185 = vunpack.c.l.b16 %v132
    %v186 = vunpack.c.l.b16 %v133
    %v187 = vunpack.c.l.b16 %v134
    %v188 = vunpack.c.l.b16 %v135
    %v189 = vunpack.c.l.b16 %v136
    %v190 = vunpack.c.l.b16 %v137
    %v191 = vunpack.c.l.b16 %v138
    %v192 = vunpack.c.l.b16 %v139
    %v193 = vunpack.c.l.b16 %v140
    %v194 = vunpack.c.l.b16 %v141
    %v195 = vunpack.c.l.b16 %v142
    %v196 = vpack.c.b16 %v181, %v180
    %v197 = vpack.c.b16 %v183, %v182
    %v198 = vpack.c.b16 %v185, %v184
    %v199 = vpack.c.b16 %v187, %v186
    %v200 = vpack.c.b16 %v189, %v188
    %v201 = vpack.c.b16 %v191, %v190
    %v202 = vpack.c.b16 %v193, %v192
    %v203 = vpack.c.b16 %v195, %v194
    %212 = vmatpush.bf16.msra.mxu0 %v203
    %213 = vmatpush.bf16.msra.mxu0 %v202
    %214 = vmatpush.bf16.msra.mxu0 %v201
    %215 = vmatpush.bf16.msra.mxu0 %v200
    %216 = vmatpush.bf16.msra.mxu0 %v199
    %217 = vmatpush.bf16.msra.mxu0 %v198
    %218 = vmatpush.bf16.msra.mxu0 %v197
    %219 = vmatpush.bf16.msra.mxu0 %v196
    %220 = vmatmul.bf16.gmra.mxu0 %v158
    %v221 = vpop.f32.mrf.mxu0
    %v222 = vadd.f32 %v144, %v221
    %v223 = vpop.f32.mrf.mxu0
    %v224 = vadd.f32 %v144, %v223
    %225 = vmatmul.bf16.gmra.mxu0 %v159
    %v226 = vpop.f32.mrf.mxu0
    %v227 = vadd.f32 %v144, %v226
    %v228 = vpop.f32.mrf.mxu0
    %v229 = vadd.f32 %v144, %v228
    %230 = vmatmul.bf16.gmra.mxu0 %v160
    %v231 = vpop.f32.mrf.mxu0
    %v232 = vadd.f32 %v144, %v231
    %v233 = vpop.f32.mrf.mxu0
    %v234 = vadd.f32 %v144, %v233
    %235 = vdwg.mxu0
    %236 = vadd.xlane.f32.xlu0 %v222
    %v237 = vpop.xlane.xlu0 %236
    %238 = vadd.xlane.f32.xlu0 %v224
    %v239 = vpop.xlane.xlu0 %238
    %240 = vadd.xlane.f32.xlu0 %v227
    %v241 = vpop.xlane.xlu0 %240
    %242 = vadd.xlane.f32.xlu0 %v229
    %v243 = vpop.xlane.xlu0 %242
    %244 = vadd.xlane.f32.xlu0 %v232
    %v245 = vpop.xlane.xlu0 %244
    %246 = vadd.xlane.f32.xlu0 %v234
    %v247 = vpop.xlane.xlu0 %246
    %v248 = vmul.f32 %v237, 0.015625
    %v249 = vmul.f32 %v239, 0.015625
    %v250 = vmul.f32 %v241, 0.015625
    %v251 = vmul.f32 %v243, 0.015625
    %v252 = vmul.f32 %v245, 0.015625
    %v253 = vmul.f32 %v247, 0.015625
    %v254 = vsub.f32 %v222, %v248
    %v255 = vsub.f32 %v224, %v249
    %v256 = vsub.f32 %v227, %v250
    %v257 = vsub.f32 %v229, %v251
    %v258 = vsub.f32 %v232, %v252
    %v259 = vsub.f32 %v234, %v253
    %v260 = vsel %vm119, %v254, 0.0
    %v261 = vsel %vm119, %v255, 0.0
    %v262 = vsel %vm119, %v256, 0.0
    %v263 = vsel %vm119, %v257, 0.0
    %v264 = vsel %vm119, %v258, 0.0
    %v265 = vsel %vm119, %v259, 0.0
    %v266 = vmul.f32 %v260, %v260
    %v267 = vmul.f32 %v261, %v261
    %v268 = vmul.f32 %v262, %v262
    %v269 = vmul.f32 %v263, %v263
    %v270 = vmul.f32 %v264, %v264
    %v271 = vmul.f32 %v265, %v265
    %272 = vadd.xlane.f32.xlu0 %v266
    %v273 = vpop.xlane.xlu0 %272
    %274 = vadd.xlane.f32.xlu0 %v267
    %v275 = vpop.xlane.xlu0 %274
    %276 = vadd.xlane.f32.xlu0 %v268
    %v277 = vpop.xlane.xlu0 %276
    %278 = vadd.xlane.f32.xlu0 %v269
    %v279 = vpop.xlane.xlu0 %278
    %280 = vadd.xlane.f32.xlu0 %v270
    %v281 = vpop.xlane.xlu0 %280
    %282 = vadd.xlane.f32.xlu0 %v271
    %v283 = vpop.xlane.xlu0 %282
    %v284 = vmul.f32 %v273, 0.015625
    %v285 = vmul.f32 %v275, 0.015625
    %v286 = vmul.f32 %v277, 0.015625
    %v287 = vmul.f32 %v279, 0.015625
    %v288 = vmul.f32 %v281, 0.015625
    %v289 = vmul.f32 %v283, 0.015625
    %v290 = vadd.f32 %v284, 1e-05
    %v291 = vadd.f32 %v285, 1e-05
    %v292 = vadd.f32 %v286, 1e-05
    %v293 = vadd.f32 %v287, 1e-05
    %v294 = vadd.f32 %v288, 1e-05
    %v295 = vadd.f32 %v289, 1e-05
    %v296 = vrsqrt.pop %v290
    %v297 = vmul.f32 %v296, %v290
    %v298 = vmul.f32 %v297, %v296
    %v299 = vmul.f32 0.5, %v298
    %v300 = vsub.f32 1.5, %v299
    %v301 = vmul.f32 %v296, %v300
    %vm302 = vweird.f32 %v290
    %vm303 = vweird.f32 %v296
    %vm304 = vmor %vm302, %vm303
    %v305 = vsel %vm304, %v296, %v301
    %v306 = vrsqrt.pop %v291
    %v307 = vmul.f32 %v306, %v291
    %v308 = vmul.f32 %v307, %v306
    %v309 = vmul.f32 0.5, %v308
    %v310 = vsub.f32 1.5, %v309
    %v311 = vmul.f32 %v306, %v310
    %vm312 = vweird.f32 %v291
    %vm313 = vweird.f32 %v306
    %vm314 = vmor %vm312, %vm313
    %v315 = vsel %vm314, %v306, %v311
    %v316 = vrsqrt.pop %v292
    %v317 = vmul.f32 %v316, %v292
    %v318 = vmul.f32 %v317, %v316
    %v319 = vmul.f32 0.5, %v318
    %v320 = vsub.f32 1.5, %v319
    %v321 = vmul.f32 %v316, %v320
    %vm322 = vweird.f32 %v292
    %vm323 = vweird.f32 %v316
    %vm324 = vmor %vm322, %vm323
    %v325 = vsel %vm324, %v316, %v321
    %v326 = vrsqrt.pop %v293
    %v327 = vmul.f32 %v326, %v293
    %v328 = vmul.f32 %v327, %v326
    %v329 = vmul.f32 0.5, %v328
    %v330 = vsub.f32 1.5, %v329
    %v331 = vmul.f32 %v326, %v330
    %vm332 = vweird.f32 %v293
    %vm333 = vweird.f32 %v326
    %vm334 = vmor %vm332, %vm333
    %v335 = vsel %vm334, %v326, %v331
    %v336 = vrsqrt.pop %v294
    %v337 = vmul.f32 %v336, %v294
    %v338 = vmul.f32 %v337, %v336
    %v339 = vmul.f32 0.5, %v338
    %v340 = vsub.f32 1.5, %v339
    %v341 = vmul.f32 %v336, %v340
    %vm342 = vweird.f32 %v294
    %vm343 = vweird.f32 %v336
    %vm344 = vmor %vm342, %vm343
    %v345 = vsel %vm344, %v336, %v341
    %v346 = vrsqrt.pop %v295
    %v347 = vmul.f32 %v346, %v295
    %v348 = vmul.f32 %v347, %v346
    %v349 = vmul.f32 0.5, %v348
    %v350 = vsub.f32 1.5, %v349
    %v351 = vmul.f32 %v346, %v350
    %vm352 = vweird.f32 %v295
    %vm353 = vweird.f32 %v346
    %vm354 = vmor %vm352, %vm353
    %v355 = vsel %vm354, %v346, %v351
    %v356 = vmul.f32 %v260, %v305
    %v357 = vmul.f32 %v261, %v315
    %v358 = vmul.f32 %v262, %v325
    %v359 = vmul.f32 %v263, %v335
    %v360 = vmul.f32 %v264, %v345
    %v361 = vmul.f32 %v265, %v355
    %v363 = vperm.slane %v109, 0
    %v365 = vmul.f32 %v356, %v363
    %v366 = vmul.f32 %v357, %v363
    %v367 = vmul.f32 %v358, %v363
    %v368 = vmul.f32 %v359, %v363
    %v369 = vmul.f32 %v360, %v363
    %v370 = vmul.f32 %v361, %v363
    %v372 = vperm.slane %v110, 0
    %v374 = vadd.f32 %v365, %v372
    %v375 = vadd.f32 %v366, %v372
    %v376 = vadd.f32 %v367, %v372
    %v377 = vadd.f32 %v368, %v372
    %v378 = vadd.f32 %v369, %v372
    %v379 = vadd.f32 %v370, %v372
    %v380 = vmax.f32 %v374, 0.0
    %v381 = vmax.f32 %v375, 0.0
    %v382 = vmax.f32 %v376, 0.0
    %v383 = vmax.f32 %v377, 0.0
    %v384 = vmax.f32 %v378, 0.0
    %v385 = vmax.f32 %v379, 0.0
    %v386 = vpack.c.bf16 %v381, %v380
    %v387 = vpack.c.bf16 %v383, %v382
    %v388 = vpack.c.bf16 %v385, %v384
    %v389 = vld [vmem:[#allocation7] sm:$0xf]
    %v390 = vld [vmem:[#allocation7 + $0x4] sm:$0xf]
    %v391 = vld [vmem:[#allocation7 + $0x8] sm:$0xf]
    %v392 = vld [vmem:[#allocation7 + $0xc] sm:$0xf]
    %v393 = vld [vmem:[#allocation7 + $0x10] sm:$0xf]
    %v394 = vld [vmem:[#allocation7 + $0x14] sm:$0xf]
    %v395 = vld [vmem:[#allocation7 + $0x18] sm:$0xf]
    %v396 = vld [vmem:[#allocation7 + $0x1c] sm:$0xf]
    %v397 = vld [vmem:[#allocation7 + $0x20] sm:$0xf]
    %v398 = vld [vmem:[#allocation7 + $0x24] sm:$0xf]
    %v399 = vld [vmem:[#allocation7 + $0x28] sm:$0xf]
    %v400 = vld [vmem:[#allocation7 + $0x2c] sm:$0xf]
    %v401 = vld [vmem:[#allocation7 + $0x30] sm:$0xf]
    %v402 = vld [vmem:[#allocation7 + $0x34] sm:$0xf]
    %v403 = vld [vmem:[#allocation7 + $0x38] sm:$0xf]
    %v404 = vld [vmem:[#allocation7 + $0x3c] sm:$0xf]
    %v406 = vperm.slane %v111, 0
    %v424 = vunpack.c.l.b16 %v389
    %v425 = vunpack.c.l.b16 %v390
    %v426 = vunpack.c.l.b16 %v391
    %v427 = vunpack.c.l.b16 %v392
    %v428 = vunpack.c.l.b16 %v393
    %v429 = vunpack.c.l.b16 %v394
    %v430 = vunpack.c.l.b16 %v395
    %v431 = vunpack.c.l.b16 %v396
    %v432 = vunpack.c.l.b16 %v397
    %v433 = vunpack.c.l.b16 %v398
    %v434 = vunpack.c.l.b16 %v399
    %v435 = vunpack.c.l.b16 %v400
    %v436 = vunpack.c.l.b16 %v401
    %v437 = vunpack.c.l.b16 %v402
    %v438 = vunpack.c.l.b16 %v403
    %v439 = vunpack.c.l.b16 %v404
    %v440 = vpack.c.b16 %v425, %v424
    %v441 = vpack.c.b16 %v427, %v426
    %v442 = vpack.c.b16 %v429, %v428
    %v443 = vpack.c.b16 %v431, %v430
    %v444 = vpack.c.b16 %v433, %v432
    %v445 = vpack.c.b16 %v435, %v434
    %v446 = vpack.c.b16 %v437, %v436
    %v447 = vpack.c.b16 %v439, %v438
    %456 = vmatpush.bf16.msra.mxu0 %v447
    %457 = vmatpush.bf16.msra.mxu0 %v446
    %458 = vmatpush.bf16.msra.mxu0 %v445
    %459 = vmatpush.bf16.msra.mxu0 %v444
    %460 = vmatpush.bf16.msra.mxu0 %v443
    %461 = vmatpush.bf16.msra.mxu0 %v442
    %462 = vmatpush.bf16.msra.mxu0 %v441
    %463 = vmatpush.bf16.msra.mxu0 %v440
    %464 = vmatmul.bf16.gmra.mxu0 %v386
    %v465 = vpop.f32.mrf.mxu0
    %v466 = vadd.f32 %v406, %v465
    %v467 = vpop.f32.mrf.mxu0
    %v468 = vadd.f32 %v406, %v467
    %469 = vmatmul.bf16.gmra.mxu0 %v387
    %v470 = vpop.f32.mrf.mxu0
    %v471 = vadd.f32 %v406, %v470
    %v472 = vpop.f32.mrf.mxu0
    %v473 = vadd.f32 %v406, %v472
    %474 = vmatmul.bf16.gmra.mxu0 %v388
    %v475 = vpop.f32.mrf.mxu0
    %v476 = vadd.f32 %v406, %v475
    %v477 = vpop.f32.mrf.mxu0
    %v478 = vadd.f32 %v406, %v477
    %479 = vdwg.mxu0
    %480 = vadd.xlane.f32.xlu0 %v466
    %v481 = vpop.xlane.xlu0 %480
    %482 = vadd.xlane.f32.xlu0 %v468
    %v483 = vpop.xlane.xlu0 %482
    %484 = vadd.xlane.f32.xlu0 %v471
    %v485 = vpop.xlane.xlu0 %484
    %486 = vadd.xlane.f32.xlu0 %v473
    %v487 = vpop.xlane.xlu0 %486
    %488 = vadd.xlane.f32.xlu0 %v476
    %v489 = vpop.xlane.xlu0 %488
    %490 = vadd.xlane.f32.xlu0 %v478
    %v491 = vpop.xlane.xlu0 %490
    %v492 = vmul.f32 %v481, 0.015625
    %v493 = vmul.f32 %v483, 0.015625
    %v494 = vmul.f32 %v485, 0.015625
    %v495 = vmul.f32 %v487, 0.015625
    %v496 = vmul.f32 %v489, 0.015625
    %v497 = vmul.f32 %v491, 0.015625
    %v498 = vsub.f32 %v466, %v492
    %v499 = vsub.f32 %v468, %v493
    %v500 = vsub.f32 %v471, %v494
    %v501 = vsub.f32 %v473, %v495
    %v502 = vsub.f32 %v476, %v496
    %v503 = vsub.f32 %v478, %v497
    %v504 = vsel %vm119, %v498, 0.0
    %v505 = vsel %vm119, %v499, 0.0
    %v506 = vsel %vm119, %v500, 0.0
    %v507 = vsel %vm119, %v501, 0.0
    %v508 = vsel %vm119, %v502, 0.0
    %v509 = vsel %vm119, %v503, 0.0
    %v510 = vmul.f32 %v504, %v504
    %v511 = vmul.f32 %v505, %v505
    %v512 = vmul.f32 %v506, %v506
    %v513 = vmul.f32 %v507, %v507
    %v514 = vmul.f32 %v508, %v508
    %v515 = vmul.f32 %v509, %v509
    %516 = vadd.xlane.f32.xlu0 %v510
    %v517 = vpop.xlane.xlu0 %516
    %518 = vadd.xlane.f32.xlu0 %v511
    %v519 = vpop.xlane.xlu0 %518
    %520 = vadd.xlane.f32.xlu0 %v512
    %v521 = vpop.xlane.xlu0 %520
    %522 = vadd.xlane.f32.xlu0 %v513
    %v523 = vpop.xlane.xlu0 %522
    %524 = vadd.xlane.f32.xlu0 %v514
    %v525 = vpop.xlane.xlu0 %524
    %526 = vadd.xlane.f32.xlu0 %v515
    %v527 = vpop.xlane.xlu0 %526
    %v528 = vmul.f32 %v517, 0.015625
    %v529 = vmul.f32 %v519, 0.015625
    %v530 = vmul.f32 %v521, 0.015625
    %v531 = vmul.f32 %v523, 0.015625
    %v532 = vmul.f32 %v525, 0.015625
    %v533 = vmul.f32 %v527, 0.015625
    %v534 = vadd.f32 %v528, 1e-05
    %v535 = vadd.f32 %v529, 1e-05
    %v536 = vadd.f32 %v530, 1e-05
    %v537 = vadd.f32 %v531, 1e-05
    %v538 = vadd.f32 %v532, 1e-05
    %v539 = vadd.f32 %v533, 1e-05
    %v540 = vrsqrt.pop %v534
    %v541 = vmul.f32 %v540, %v534
    %v542 = vmul.f32 %v541, %v540
    %v543 = vmul.f32 0.5, %v542
    %v544 = vsub.f32 1.5, %v543
    %v545 = vmul.f32 %v540, %v544
    %vm546 = vweird.f32 %v534
    %vm547 = vweird.f32 %v540
    %vm548 = vmor %vm546, %vm547
    %v549 = vsel %vm548, %v540, %v545
    %v550 = vrsqrt.pop %v535
    %v551 = vmul.f32 %v550, %v535
    %v552 = vmul.f32 %v551, %v550
    %v553 = vmul.f32 0.5, %v552
    %v554 = vsub.f32 1.5, %v553
    %v555 = vmul.f32 %v550, %v554
    %vm556 = vweird.f32 %v535
    %vm557 = vweird.f32 %v550
    %vm558 = vmor %vm556, %vm557
    %v559 = vsel %vm558, %v550, %v555
    %v560 = vrsqrt.pop %v536
    %v561 = vmul.f32 %v560, %v536
    %v562 = vmul.f32 %v561, %v560
    %v563 = vmul.f32 0.5, %v562
    %v564 = vsub.f32 1.5, %v563
    %v565 = vmul.f32 %v560, %v564
    %vm566 = vweird.f32 %v536
    %vm567 = vweird.f32 %v560
    %vm568 = vmor %vm566, %vm567
    %v569 = vsel %vm568, %v560, %v565
    %v570 = vrsqrt.pop %v537
    %v571 = vmul.f32 %v570, %v537
    %v572 = vmul.f32 %v571, %v570
    %v573 = vmul.f32 0.5, %v572
    %v574 = vsub.f32 1.5, %v573
    %v575 = vmul.f32 %v570, %v574
    %vm576 = vweird.f32 %v537
    %vm577 = vweird.f32 %v570
    %vm578 = vmor %vm576, %vm577
    %v579 = vsel %vm578, %v570, %v575
    %v580 = vrsqrt.pop %v538
    %v581 = vmul.f32 %v580, %v538
    %v582 = vmul.f32 %v581, %v580
    %v583 = vmul.f32 0.5, %v582
    %v584 = vsub.f32 1.5, %v583
    %v585 = vmul.f32 %v580, %v584
    %vm586 = vweird.f32 %v538
    %vm587 = vweird.f32 %v580
    %vm588 = vmor %vm586, %vm587
    %v589 = vsel %vm588, %v580, %v585
    %v590 = vrsqrt.pop %v539
    %v591 = vmul.f32 %v590, %v539
    %v592 = vmul.f32 %v591, %v590
    %v593 = vmul.f32 0.5, %v592
    %v594 = vsub.f32 1.5, %v593
    %v595 = vmul.f32 %v590, %v594
    %vm596 = vweird.f32 %v539
    %vm597 = vweird.f32 %v590
    %vm598 = vmor %vm596, %vm597
    %v599 = vsel %vm598, %v590, %v595
    %v600 = vmul.f32 %v504, %v549
    %v601 = vmul.f32 %v505, %v559
    %v602 = vmul.f32 %v506, %v569
    %v603 = vmul.f32 %v507, %v579
    %v604 = vmul.f32 %v508, %v589
    %v605 = vmul.f32 %v509, %v599
    %v607 = vperm.slane %v112, 0
    %v609 = vmul.f32 %v600, %v607
    %v610 = vmul.f32 %v601, %v607
    %v611 = vmul.f32 %v602, %v607
    %v612 = vmul.f32 %v603, %v607
    %v613 = vmul.f32 %v604, %v607
    %v614 = vmul.f32 %v605, %v607
    %v616 = vperm.slane %v113, 0
    %v618 = vadd.f32 %v609, %v616
    %v619 = vadd.f32 %v610, %v616
    %v620 = vadd.f32 %v611, %v616
    %v621 = vadd.f32 %v612, %v616
    %v622 = vadd.f32 %v613, %v616
    %v623 = vadd.f32 %v614, %v616
    %v624 = vmax.f32 %v618, 0.0
    %v625 = vmax.f32 %v619, 0.0
    %v626 = vmax.f32 %v620, 0.0
    %v627 = vmax.f32 %v621, 0.0
    %v628 = vmax.f32 %v622, 0.0
    %v629 = vmax.f32 %v623, 0.0
    %v630 = vpack.c.bf16 %v625, %v624
    %v631 = vpack.c.bf16 %v627, %v626
    %v632 = vpack.c.bf16 %v629, %v628
    %v633 = vld [vmem:[#allocation8] sm:$0xf]
    %v634 = vld [vmem:[#allocation8 + $0x4] sm:$0xf]
    %v635 = vld [vmem:[#allocation8 + $0x8] sm:$0xf]
    %v636 = vld [vmem:[#allocation8 + $0xc] sm:$0xf]
    %v637 = vld [vmem:[#allocation8 + $0x10] sm:$0xf]
    %v638 = vld [vmem:[#allocation8 + $0x14] sm:$0xf]
    %v639 = vld [vmem:[#allocation8 + $0x18] sm:$0xf]
    %v640 = vld [vmem:[#allocation8 + $0x1c] sm:$0xf]
    %v641 = vld [vmem:[#allocation8 + $0x20] sm:$0xf]
    %v642 = vld [vmem:[#allocation8 + $0x24] sm:$0xf]
    %v643 = vld [vmem:[#allocation8 + $0x28] sm:$0xf]
    %v644 = vld [vmem:[#allocation8 + $0x2c] sm:$0xf]
    %v645 = vld [vmem:[#allocation8 + $0x30] sm:$0xf]
    %v646 = vld [vmem:[#allocation8 + $0x34] sm:$0xf]
    %v647 = vld [vmem:[#allocation8 + $0x38] sm:$0xf]
    %v648 = vld [vmem:[#allocation8 + $0x3c] sm:$0xf]
    %v650 = vperm.slane %v114, 0
    %v668 = vunpack.c.l.b16 %v633
    %v669 = vunpack.c.l.b16 %v634
    %v670 = vunpack.c.l.b16 %v635
    %v671 = vunpack.c.l.b16 %v636
    %v672 = vunpack.c.l.b16 %v637
    %v673 = vunpack.c.l.b16 %v638
    %v674 = vunpack.c.l.b16 %v639
    %v675 = vunpack.c.l.b16 %v640
    %v676 = vunpack.c.l.b16 %v641
    %v677 = vunpack.c.l.b16 %v642
    %v678 = vunpack.c.l.b16 %v643
    %v679 = vunpack.c.l.b16 %v644
    %v680 = vunpack.c.l.b16 %v645
    %v681 = vunpack.c.l.b16 %v646
    %v682 = vunpack.c.l.b16 %v647
    %v683 = vunpack.c.l.b16 %v648
    %v684 = vpack.c.b16 %v669, %v668
    %v685 = vpack.c.b16 %v671, %v670
    %v686 = vpack.c.b16 %v673, %v672
    %v687 = vpack.c.b16 %v675, %v674
    %v688 = vpack.c.b16 %v677, %v676
    %v689 = vpack.c.b16 %v679, %v678
    %v690 = vpack.c.b16 %v681, %v680
    %v691 = vpack.c.b16 %v683, %v682
    %700 = vmatpush.bf16.msra.mxu0 %v691
    %701 = vmatpush.bf16.msra.mxu0 %v690
    %702 = vmatpush.bf16.msra.mxu0 %v689
    %703 = vmatpush.bf16.msra.mxu0 %v688
    %704 = vmatpush.bf16.msra.mxu0 %v687
    %705 = vmatpush.bf16.msra.mxu0 %v686
    %706 = vmatpush.bf16.msra.mxu0 %v685
    %707 = vmatpush.bf16.msra.mxu0 %v684
    %708 = vmatmul.bf16.gmra.mxu0 %v630
    %v709 = vpop.f32.mrf.mxu0
    %v710 = vadd.f32 %v650, %v709
    %v711 = vpop.f32.mrf.mxu0
    %v712 = vadd.f32 %v650, %v711
    %713 = vmatmul.bf16.gmra.mxu0 %v631
    %v714 = vpop.f32.mrf.mxu0
    %v715 = vadd.f32 %v650, %v714
    %v716 = vpop.f32.mrf.mxu0
    %v717 = vadd.f32 %v650, %v716
    %718 = vmatmul.bf16.gmra.mxu0 %v632
    %v719 = vpop.f32.mrf.mxu0
    %v720 = vadd.f32 %v650, %v719
    %v721 = vpop.f32.mrf.mxu0
    %v722 = vadd.f32 %v650, %v721
    %723 = vdwg.mxu0
    %724 = vadd.xlane.f32.xlu0 %v710
    %v725 = vpop.xlane.xlu0 %724
    %726 = vadd.xlane.f32.xlu0 %v712
    %v727 = vpop.xlane.xlu0 %726
    %728 = vadd.xlane.f32.xlu0 %v715
    %v729 = vpop.xlane.xlu0 %728
    %730 = vadd.xlane.f32.xlu0 %v717
    %v731 = vpop.xlane.xlu0 %730
    %732 = vadd.xlane.f32.xlu0 %v720
    %v733 = vpop.xlane.xlu0 %732
    %734 = vadd.xlane.f32.xlu0 %v722
    %v735 = vpop.xlane.xlu0 %734
    %v736 = vmul.f32 %v725, 0.0625
    %v737 = vmul.f32 %v727, 0.0625
    %v738 = vmul.f32 %v729, 0.0625
    %v739 = vmul.f32 %v731, 0.0625
    %v740 = vmul.f32 %v733, 0.0625
    %v741 = vmul.f32 %v735, 0.0625
    %v742 = vsub.f32 %v710, %v736
    %v743 = vsub.f32 %v712, %v737
    %v744 = vsub.f32 %v715, %v738
    %v745 = vsub.f32 %v717, %v739
    %v746 = vsub.f32 %v720, %v740
    %v747 = vsub.f32 %v722, %v741
    %v748 = vsel %vm120, %v742, 0.0
    %v749 = vsel %vm120, %v743, 0.0
    %v750 = vsel %vm120, %v744, 0.0
    %v751 = vsel %vm120, %v745, 0.0
    %v752 = vsel %vm120, %v746, 0.0
    %v753 = vsel %vm120, %v747, 0.0
    %v754 = vmul.f32 %v748, %v748
    %v755 = vmul.f32 %v749, %v749
    %v756 = vmul.f32 %v750, %v750
    %v757 = vmul.f32 %v751, %v751
    %v758 = vmul.f32 %v752, %v752
    %v759 = vmul.f32 %v753, %v753
    %760 = vadd.xlane.f32.xlu0 %v754
    %v761 = vpop.xlane.xlu0 %760
    %762 = vadd.xlane.f32.xlu0 %v755
    %v763 = vpop.xlane.xlu0 %762
    %764 = vadd.xlane.f32.xlu0 %v756
    %v765 = vpop.xlane.xlu0 %764
    %766 = vadd.xlane.f32.xlu0 %v757
    %v767 = vpop.xlane.xlu0 %766
    %768 = vadd.xlane.f32.xlu0 %v758
    %v769 = vpop.xlane.xlu0 %768
    %770 = vadd.xlane.f32.xlu0 %v759
    %v771 = vpop.xlane.xlu0 %770
    %v772 = vmul.f32 %v761, 0.0625
    %v773 = vmul.f32 %v763, 0.0625
    %v774 = vmul.f32 %v765, 0.0625
    %v775 = vmul.f32 %v767, 0.0625
    %v776 = vmul.f32 %v769, 0.0625
    %v777 = vmul.f32 %v771, 0.0625
    %v778 = vadd.f32 %v772, 1e-05
    %v779 = vadd.f32 %v773, 1e-05
    %v780 = vadd.f32 %v774, 1e-05
    %v781 = vadd.f32 %v775, 1e-05
    %v782 = vadd.f32 %v776, 1e-05
    %v783 = vadd.f32 %v777, 1e-05
    %v784 = vrsqrt.pop %v778
    %v785 = vmul.f32 %v784, %v778
    %v786 = vmul.f32 %v785, %v784
    %v787 = vmul.f32 0.5, %v786
    %v788 = vsub.f32 1.5, %v787
    %v789 = vmul.f32 %v784, %v788
    %vm790 = vweird.f32 %v778
    %vm791 = vweird.f32 %v784
    %vm792 = vmor %vm790, %vm791
    %v793 = vsel %vm792, %v784, %v789
    %v794 = vrsqrt.pop %v779
    %v795 = vmul.f32 %v794, %v779
    %v796 = vmul.f32 %v795, %v794
    %v797 = vmul.f32 0.5, %v796
    %v798 = vsub.f32 1.5, %v797
    %v799 = vmul.f32 %v794, %v798
    %vm800 = vweird.f32 %v779
    %vm801 = vweird.f32 %v794
    %vm802 = vmor %vm800, %vm801
    %v803 = vsel %vm802, %v794, %v799
    %v804 = vrsqrt.pop %v780
    %v805 = vmul.f32 %v804, %v780
    %v806 = vmul.f32 %v805, %v804
    %v807 = vmul.f32 0.5, %v806
    %v808 = vsub.f32 1.5, %v807
    %v809 = vmul.f32 %v804, %v808
    %vm810 = vweird.f32 %v780
    %vm811 = vweird.f32 %v804
    %vm812 = vmor %vm810, %vm811
    %v813 = vsel %vm812, %v804, %v809
    %v814 = vrsqrt.pop %v781
    %v815 = vmul.f32 %v814, %v781
    %v816 = vmul.f32 %v815, %v814
    %v817 = vmul.f32 0.5, %v816
    %v818 = vsub.f32 1.5, %v817
    %v819 = vmul.f32 %v814, %v818
    %vm820 = vweird.f32 %v781
    %vm821 = vweird.f32 %v814
    %vm822 = vmor %vm820, %vm821
    %v823 = vsel %vm822, %v814, %v819
    %v824 = vrsqrt.pop %v782
    %v825 = vmul.f32 %v824, %v782
    %v826 = vmul.f32 %v825, %v824
    %v827 = vmul.f32 0.5, %v826
    %v828 = vsub.f32 1.5, %v827
    %v829 = vmul.f32 %v824, %v828
    %vm830 = vweird.f32 %v782
    %vm831 = vweird.f32 %v824
    %vm832 = vmor %vm830, %vm831
    %v833 = vsel %vm832, %v824, %v829
    %v834 = vrsqrt.pop %v783
    %v835 = vmul.f32 %v834, %v783
    %v836 = vmul.f32 %v835, %v834
    %v837 = vmul.f32 0.5, %v836
    %v838 = vsub.f32 1.5, %v837
    %v839 = vmul.f32 %v834, %v838
    %vm840 = vweird.f32 %v783
    %vm841 = vweird.f32 %v834
    %vm842 = vmor %vm840, %vm841
    %v843 = vsel %vm842, %v834, %v839
    %v844 = vmul.f32 %v748, %v793
    %v845 = vmul.f32 %v749, %v803
    %v846 = vmul.f32 %v750, %v813
    %v847 = vmul.f32 %v751, %v823
    %v848 = vmul.f32 %v752, %v833
    %v849 = vmul.f32 %v753, %v843
    %v851 = vperm.slane %v115, 0
    %v853 = vmul.f32 %v844, %v851
    %v854 = vmul.f32 %v845, %v851
    %v855 = vmul.f32 %v846, %v851
    %v856 = vmul.f32 %v847, %v851
    %v857 = vmul.f32 %v848, %v851
    %v858 = vmul.f32 %v849, %v851
    %v860 = vperm.slane %v116, 0
    %v862 = vadd.f32 %v853, %v860
    %v863 = vadd.f32 %v854, %v860
    %v864 = vadd.f32 %v855, %v860
    %v865 = vadd.f32 %v856, %v860
    %v866 = vadd.f32 %v857, %v860
    %v867 = vadd.f32 %v858, %v860
    %v868 = vmax.f32 %v862, 0.0
    %v869 = vmax.f32 %v863, 0.0
    %v870 = vmax.f32 %v864, 0.0
    %v871 = vmax.f32 %v865, 0.0
    %v872 = vmax.f32 %v866, 0.0
    %v873 = vmax.f32 %v867, 0.0
    %v874 = vtanh.pop %v868
    %v875 = vtanh.pop %v869
    %v876 = vtanh.pop %v870
    %v877 = vtanh.pop %v871
    %v878 = vtanh.pop %v872
    %v879 = vtanh.pop %v873
    %880 = vst [vmem:[#allocation10] sm:$0xff] %v874
    %881 = vst [vmem:[#allocation10 + $0x8] sm:$0xff] %v875
    %882 = vst [vmem:[#allocation10 + $0x10] sm:$0xff] %v876
    %883 = vst [vmem:[#allocation10 + $0x18] sm:$0xff] %v877
    %884 = vst [vmem:[#allocation10 + $0x20] sm:$0xff] %v878
    %885 = vst [vmem:[#allocation10 + $0x28] sm:$0xff] %v879
    // Predicated region
    $region70: #{tpu_custom_call.1} parent=1 // pred_check
      _
    $region71: #{tpu_custom_call.1} parent=1 // pred_check_branch
      %887 = sbr.rel (0) target = $region73
    $region72: #{tpu_custom_call.1} parent=1 // pred_region
      %889 = vsyncadd [#allocation4], 0
      %s890 = sshll.u32 [#allocation10], 4
      %s891 = int_to_ptr.vmem [resolvable:$true] %s890
      %s892 = sshll.u32 %s13, 4
      %s893 = int_to_ptr.hbm [resolvable:$true] %s892
      %898 = dma.vmem_to_hbm [thread:$0]  %s891, 768, %s893, [#allocation4], 128, 128, 8
    $region73: #{tpu_custom_call.1} parent=1 // pred_fallthru
      _
    // Predicated region
    $region74: #{tpu_custom_call.1} parent=1 // pred_check
      _
    $region75: #{tpu_custom_call.1} parent=1 // pred_check_branch
      %900 = sbr.rel (0) target = $region77
    $region76: #{tpu_custom_call.1} parent=1 // pred_region
      %902 = dma.done [#allocation4], 768
    $region77: #{tpu_custom_call.1} parent=1 // pred_fallthru
      _
    %903 = vsyncpa [#allocation3], 1
    %904 = vsyncpa [#allocation6], 1
    %905 = vsyncpa [#allocation9], 1
    %906 = vsyncpa [#allocation4], 1

</llo_original>
